<compile_context>
chip_gen: v5e
topology: v5e:2x2
jax: 0.10.0
libtpu: 0.0.40
codegen_flags: <defaults>
</compile_context>

<pallas_src>
import jax
import jax.numpy as jnp
from jax.experimental import pallas as pl
from jax.experimental.pallas import tpu as pltpu

HIDDEN = 128  # nn.Linear(in_dim, 128)


def _round_up(x, m):
    return ((x + m - 1) // m) * m


def _projection_head_kernel(x_ref, w1_ref, b1_ref, w2_ref, b2_ref, o_ref, acc_ref):
    k = pl.program_id(1)

    @pl.when(k == 0)
    def _():
        acc_ref[...] = jnp.zeros_like(acc_ref)

    # fc1 partial: (tb, tk)bf16 @ (tk, 128)bf16 -> f32 accumulator on the MXU.
    acc_ref[...] += jnp.dot(
        x_ref[...], w1_ref[...], preferred_element_type=jnp.float32
    )

    @pl.when(k == pl.num_programs(1) - 1)
    def _():
        # bias + ReLU in f32 on the VPU.
        h = jnp.maximum(acc_ref[...] + b1_ref[...], 0.0)
        # fc2: (tb, 128)bf16 @ (128, N_pad)bf16 -> f32, lane-dense store.
        o = jnp.dot(
            h.astype(w2_ref.dtype), w2_ref[...], preferred_element_type=jnp.float32
        )
        o_ref[...] = (o + b2_ref[...]).astype(o_ref.dtype)


def projection_head(x, w1, b1, w2, b2, *, block_b=None, block_k=None):
    """x: (B, in_dim); w1: (in_dim, 128); b1: (128,); w2: (128, out_dim); b2: (out_dim,).

    Returns f32 (B, out_dim). Matmuls run in bf16 with f32 accumulation.
    """
    B, in_dim = x.shape
    assert w1.shape == (in_dim, HIDDEN)
    assert b1.shape == (HIDDEN,)
    assert w2.shape[0] == HIDDEN
    out_dim = w2.shape[1]
    assert b2.shape == (out_dim,)

    # --- tile selection -----------------------------------------------------
    if block_b is None:
        block_b = min(256, _round_up(B, 8))   # fill MXU rows, keep grid steps
    block_b = max(8, _round_up(block_b, 8))
    if block_k is None:
        block_k = min(2048, _round_up(in_dim, 128))  # VMEM-friendly x/w1 tiles
    block_k = max(128, _round_up(block_k, 128))

    B_pad = _round_up(B, block_b)
    K_pad = _round_up(in_dim, block_k)
    N_pad = _round_up(out_dim, 128)           # lane-dense output (unmasked vst)

    # --- pad & cast operands (wrapper-side, zero padding is exact) -----------
    x_p = jnp.pad(x.astype(jnp.bfloat16), ((0, B_pad - B), (0, K_pad - in_dim)))
    w1_p = jnp.pad(w1.astype(jnp.bfloat16), ((0, K_pad - in_dim), (0, 0)))
    w2_p = jnp.pad(w2.astype(jnp.bfloat16), ((0, 0), (0, N_pad - out_dim)))
    b1_p = b1.reshape(1, HIDDEN).astype(jnp.float32)
    b2_p = jnp.pad(b2.reshape(1, out_dim).astype(jnp.float32),
                   ((0, 0), (0, N_pad - out_dim)))

    grid = (B_pad // block_b, K_pad // block_k)  # batch parallel, K reduction last

    out_p = pl.pallas_call(
        _projection_head_kernel,
        out_shape=jax.ShapeDtypeStruct((B_pad, N_pad), jnp.float32),
        grid=grid,
        in_specs=[
            pl.BlockSpec((block_b, block_k), lambda i, k: (i, k)),   # x tile
            pl.BlockSpec((block_k, HIDDEN), lambda i, k: (k, 0)),    # w1 K-slab
            pl.BlockSpec((1, HIDDEN), lambda i, k: (0, 0)),          # b1 (resident)
            pl.BlockSpec((HIDDEN, N_pad), lambda i, k: (0, 0)),      # w2 (resident)
            pl.BlockSpec((1, N_pad), lambda i, k: (0, 0)),           # b2 (resident)
        ],
        out_specs=pl.BlockSpec((block_b, N_pad), lambda i, k: (i, 0)),
        scratch_shapes=[pltpu.VMEM((block_b, HIDDEN), jnp.float32)],  # fc1 accumulator
        compiler_params=pltpu.CompilerParams(
            dimension_semantics=("parallel", "arbitrary"),
        ),
    )(x_p, w1_p, b1_p, w2_p, b2_p)

    return out_p[:B, :out_dim]


if __name__ == "__main__":
    # Small shapes consistent with the module: flat feature vector per example.
    # B deliberately not a multiple of 8 and block_k forced small so both the
    # batch-padding path and the multi-step K accumulation path are exercised.
    B, in_dim, out_dim = 10, 256, 64

    key = jax.random.PRNGKey(0)
    kx, kw1, kb1, kw2, kb2 = jax.random.split(key, 5)

    x = jax.random.normal(kx, (B, in_dim), dtype=jnp.float32)

    # PyTorch shapes: fc1.weight (128, in_dim), fc2.weight (out_dim, 128);
    # stored here already transposed for x @ W.
    w1 = jax.random.normal(kw1, (in_dim, HIDDEN), dtype=jnp.float32) * 0.05
    b1 = jax.random.normal(kb1, (HIDDEN,), dtype=jnp.float32) * 0.05
    w2 = jax.random.normal(kw2, (HIDDEN, out_dim), dtype=jnp.float32) * 0.05
    b2 = jax.random.normal(kb2, (out_dim,), dtype=jnp.float32) * 0.05

    out = projection_head(x, w1, b1, w2, b2, block_k=128)
    out = jax.block_until_ready(out)
    assert out.shape == (B, out_dim)

    # Matched-precision reference (same bf16-in / f32-accumulate recipe).
    x_bf, w1_bf, w2_bf = (a.astype(jnp.bfloat16) for a in (x, w1, w2))
    h_ref = jnp.maximum(
        jnp.dot(x_bf, w1_bf, preferred_element_type=jnp.float32) + b1, 0.0)
    ref_bf = jnp.dot(h_ref.astype(jnp.bfloat16), w2_bf,
                     preferred_element_type=jnp.float32) + b2
    assert jnp.allclose(out, ref_bf, atol=5e-3, rtol=5e-3)

    # Full-f32 reference (semantics sanity check, looser tolerance for bf16 inputs).
    ref_f32 = jnp.maximum(x @ w1 + b1, 0.0) @ w2 + b2
    assert jnp.allclose(out, ref_f32, atol=5e-2, rtol=5e-2)

    print("KERNEL_OK")
</pallas_src>

<mosaic_0001>
module attributes {stable_mosaic.version = 11 : i64} {
  func.func @_projection_head_kernel(%arg0: i32, %arg1: i32, %arg2: memref<16x128xbf16, #tpu.memory_space<vmem>>, %arg3: memref<128x128xbf16, #tpu.memory_space<vmem>>, %arg4: memref<1x128xf32, #tpu.memory_space<vmem>>, %arg5: memref<128x128xbf16, #tpu.memory_space<vmem>>, %arg6: memref<1x128xf32, #tpu.memory_space<vmem>>, %arg7: memref<16x128xf32, #tpu.memory_space<vmem>>, %arg8: memref<16x128xf32, #tpu.memory_space<vmem>>) attributes {dimension_semantics = [#tpu.dimension_semantics<parallel>, #tpu.dimension_semantics<arbitrary>], iteration_bounds = array<i64: 1, 2>, scalar_prefetch = 0 : i64, scratch_operands = 1 : i64, tpu.core_type = #tpu.core_type<tc>, window_params = [{transform_indices = @transform_0, window_bounds = array<i64: 16, 128>}, {transform_indices = @transform_1, window_bounds = array<i64: 128, 128>}, {pipeline_mode = #tpu.pipeline_mode<synchronous>, transform_indices = @transform_2, window_bounds = array<i64: 1, 128>}, {pipeline_mode = #tpu.pipeline_mode<synchronous>, transform_indices = @transform_3, window_bounds = array<i64: 128, 128>}, {pipeline_mode = #tpu.pipeline_mode<synchronous>, transform_indices = @transform_4, window_bounds = array<i64: 1, 128>}, {transform_indices = @transform_5, window_bounds = array<i64: 16, 128>}]} {
    %c0_i32 = arith.constant 0 : i32
    %0 = arith.cmpi eq, %arg1, %c0_i32 : i32
    %1 = arith.extui %0 : i1 to i32
    %c0_i32_0 = arith.constant 0 : i32
    %2 = arith.cmpi ne, %1, %c0_i32_0 : i32
    scf.if %2 {
      %cst_9 = arith.constant 0.000000e+00 : f32
      %12 = vector.broadcast %cst_9 : f32 to vector<16x128xf32>
      %c0_10 = arith.constant 0 : index
      %c0_11 = arith.constant 0 : index
      %13 = vector.load %arg8[%c0_10, %c0_11] : memref<16x128xf32, #tpu.memory_space<vmem>>, vector<16x128xf32>
      tpu.vector_store %arg8[%c0_10, %c0_11], %12 {strides = array<i32>} : memref<16x128xf32, #tpu.memory_space<vmem>>, vector<16x128xf32>,
    } else {
    }
    %c0 = arith.constant 0 : index
    %c0_1 = arith.constant 0 : index
    %3 = vector.load %arg8[%c0, %c0_1] : memref<16x128xf32, #tpu.memory_space<vmem>>, vector<16x128xf32>
    %c0_2 = arith.constant 0 : index
    %c0_3 = arith.constant 0 : index
    %4 = vector.load %arg2[%c0_2, %c0_3] : memref<16x128xbf16, #tpu.memory_space<vmem>>, vector<16x128xbf16>
    %c0_4 = arith.constant 0 : index
    %c0_5 = arith.constant 0 : index
    %5 = vector.load %arg3[%c0_4, %c0_5] : memref<128x128xbf16, #tpu.memory_space<vmem>>, vector<128x128xbf16>
    %cst = arith.constant dense<0.000000e+00> : vector<16x128xf32>
    %6 = tpu.matmul %4, %5, %cst {dimension_numbers = #tpu.dot_dimension_numbers<[1], [0], [0], [1], [0, 0, 1, 1], [], []>} : vector<16x128xbf16>, vector<128x128xbf16>, vector<16x128xf32> -> vector<16x128xf32>
    %7 = arith.addf %3, %6 : vector<16x128xf32>
    %c0_6 = arith.constant 0 : index
    %c0_7 = arith.constant 0 : index
    %8 = vector.load %arg8[%c0_6, %c0_7] : memref<16x128xf32, #tpu.memory_space<vmem>>, vector<16x128xf32>
    tpu.vector_store %arg8[%c0_6, %c0_7], %7 {strides = array<i32>} : memref<16x128xf32, #tpu.memory_space<vmem>>, vector<16x128xf32>,
    %c1_i32 = arith.constant 1 : i32
    %9 = arith.cmpi eq, %arg1, %c1_i32 : i32
    %10 = arith.extui %9 : i1 to i32
    %c0_i32_8 = arith.constant 0 : i32
    %11 = arith.cmpi ne, %10, %c0_i32_8 : i32
    scf.if %11 {
      %c0_9 = arith.constant 0 : index
      %c0_10 = arith.constant 0 : index
      %12 = vector.load %arg8[%c0_9, %c0_10] : memref<16x128xf32, #tpu.memory_space<vmem>>, vector<16x128xf32>
      %c0_11 = arith.constant 0 : index
      %c0_12 = arith.constant 0 : index
      %13 = vector.load %arg4[%c0_11, %c0_12] : memref<1x128xf32, #tpu.memory_space<vmem>>, vector<1x128xf32>
      %14 = vector.broadcast %13 : vector<1x128xf32> to vector<16x128xf32>
      %15 = arith.addf %12, %14 : vector<16x128xf32>
      %cst_13 = arith.constant 0.000000e+00 : f32
      %16 = vector.broadcast %cst_13 : f32 to vector<16x128xf32>
      %17 = arith.maximumf %15, %16 : vector<16x128xf32>
      %18 = arith.truncf %17 : vector<16x128xf32> to vector<16x128xbf16>
      %c0_14 = arith.constant 0 : index
      %c0_15 = arith.constant 0 : index
      %19 = vector.load %arg5[%c0_14, %c0_15] : memref<128x128xbf16, #tpu.memory_space<vmem>>, vector<128x128xbf16>
      %cst_16 = arith.constant dense<0.000000e+00> : vector<16x128xf32>
      %20 = tpu.matmul %18, %19, %cst_16 {dimension_numbers = #tpu.dot_dimension_numbers<[1], [0], [0], [1], [0, 0, 1, 1], [], []>} : vector<16x128xbf16>, vector<128x128xbf16>, vector<16x128xf32> -> vector<16x128xf32>
      %c0_17 = arith.constant 0 : index
      %c0_18 = arith.constant 0 : index
      %21 = vector.load %arg6[%c0_17, %c0_18] : memref<1x128xf32, #tpu.memory_space<vmem>>, vector<1x128xf32>
      %22 = vector.broadcast %21 : vector<1x128xf32> to vector<16x128xf32>
      %23 = arith.addf %20, %22 : vector<16x128xf32>
      %c0_19 = arith.constant 0 : index
      %c0_20 = arith.constant 0 : index
      %24 = vector.load %arg7[%c0_19, %c0_20] : memref<16x128xf32, #tpu.memory_space<vmem>>, vector<16x128xf32>
      tpu.vector_store %arg7[%c0_19, %c0_20], %23 {strides = array<i32>} : memref<16x128xf32, #tpu.memory_space<vmem>>, vector<16x128xf32>,
    } else {
    }
    return
  }
  func.func @transform_0(%arg0: i32, %arg1: i32) -> (i32, i32) {
    %c0_i32 = arith.constant 0 : i32
    return %arg0, %arg1 : i32, i32
  }
  func.func @transform_1(%arg0: i32, %arg1: i32) -> (i32, i32) {
    %c0_i32 = arith.constant 0 : i32
    %c0_i32_0 = arith.constant 0 : i32
    return %arg1, %c0_i32 : i32, i32
  }
  func.func @transform_2(%arg0: i32, %arg1: i32) -> (i32, i32) {
    %c0_i32 = arith.constant 0 : i32
    %c0_i32_0 = arith.constant 0 : i32
    %c0_i32_1 = arith.constant 0 : i32
    return %c0_i32, %c0_i32_0 : i32, i32
  }
  func.func @transform_3(%arg0: i32, %arg1: i32) -> (i32, i32) {
    %c0_i32 = arith.constant 0 : i32
    %c0_i32_0 = arith.constant 0 : i32
    %c0_i32_1 = arith.constant 0 : i32
    return %c0_i32, %c0_i32_0 : i32, i32
  }
  func.func @transform_4(%arg0: i32, %arg1: i32) -> (i32, i32) {
    %c0_i32 = arith.constant 0 : i32
    %c0_i32_0 = arith.constant 0 : i32
    %c0_i32_1 = arith.constant 0 : i32
    return %c0_i32, %c0_i32_0 : i32, i32
  }
  func.func @transform_5(%arg0: i32, %arg1: i32) -> (i32, i32) {
    %c0_i32 = arith.constant 0 : i32
    %c0_i32_0 = arith.constant 0 : i32
    return %arg0, %c0_i32 : i32, i32
  }
}

</mosaic_0001>

<llo_original>
// kernel: tpu_custom_call.1
$region0: #{tpu_custom_call.1}
  #allocation0 [shape = 'u32[]', space=smem, size = 0x4, offset = 0x4, fixed_abs, tag = 'smem constant byte address 0x4 - core index']
  #allocation1 [shape = 'u32[72,128]{1,0:T(1,128)}', space=vmem, size = 0x9000, scoped, tag = 'internal scratch']
  #allocation2 [shape = 'f32[16,128]{1,0:T(8,128)}', space=vmem, size = 0x2000, scoped, tag = 'scratch operand']
  %s0 = inlined_call_operand.hbm [shape: bf16[16,256], index: 0, kind: input, shape index: {}]
  %s1 = inlined_call_operand.hbm [shape: bf16[256,128], index: 1, kind: input, shape index: {}]
  %s2 = inlined_call_operand.vmem [shape: f32[1,128], index: 2, kind: input, shape index: {}]
  %s3 = inlined_call_operand.hbm [shape: bf16[128,128], index: 3, kind: input, shape index: {}]
  %s4 = inlined_call_operand.vmem [shape: f32[1,128], index: 4, kind: input, shape index: {}]
  %s5 = inlined_call_operand.hbm [shape: f32[16,128], index: 5, kind: output, shape index: {}]
  %s6 = sld [smem:[#allocation0]]
  $region73: #{tpu_custom_call.1} parent=0
    _
  %s8 = ssub.s32 1, %s6
  %s9 = scalar_select 0, %s8, %s6
  $region1: #{tpu_custom_call.1} parent=0
    #allocation3 [shape = 'u8[8192]{0}', space=vmem, size = 0x2000, scoped, tag = 'input window, operand 0']
    #allocation4 [shape = 's32[2]{0}', space=sflag, size = 0x8, scoped, tag = 'scoped memory for tpu_custom_call.1']
    #allocation5 [shape = 's32[2]{0}', space=sflag, size = 0x8, scoped, tag = 'scoped memory for tpu_custom_call.1']
    #allocation6 [shape = 'u8[65536]{0}', space=vmem, size = 0x10000, scoped, tag = 'input window, operand 1']
    #allocation7 [shape = 's32[2]{0}', space=sflag, size = 0x8, scoped, tag = 'scoped memory for tpu_custom_call.1']
    #allocation8 [shape = 'u8[32768]{0}', space=vmem, size = 0x8000, scoped, tag = 'input window, operand 3, single buffered']
    #allocation9 [shape = 'u8[8192]{0}', space=vmem, size = 0x2000, scoped, tag = 'output window, operand 0, single buffered']
    %10 = vsyncpa [#allocation4], 0
    %s11 = scalar_lea.sflag [#allocation4], 1
    %12 = vsyncpa %s11, 0
    %13 = vsyncpa [#allocation7], 0
    %s14 = scalar_lea.sflag [#allocation7], 1
    %15 = vsyncpa %s14, 0
    %16 = vsyncpa [#allocation5], 0
    loop: start=0, step=1, limit=4
    $region2: #{tpu_custom_call.1} parent=1 // loop_pre_header
      _
    $region3: #{tpu_custom_call.1} parent=1 // loop_header
      %s18 = sphi 0, %s22
      %p19 = scmp.ge.s32.totalorder %s18, 4
      %s25 = sphi 0, %s37
      %s26 = sphi 0, %s33
      %s27 = sphi 0, %s25
      %s28 = sphi 0, %s26
      %s29 = sphi 0, %s27
      %s30 = sphi 0, %s28
      %s42 = sphi 0, %s44
      %s45 = sphi 0, %s42
      %s46 = sphi 0, %s45
      %s62 = sphi 0, %s46
      %s68 = sphi 0, %s70
      %s71 = sphi 0, %s68
      %s72 = sphi 0, %s71
      %s88 = sphi 0, %s72
      %s92 = sphi 0, %s92
      %s94 = sphi 0, %s92
      %s95 = sphi 0, %s94
      %s109 = sphi 0, %s95
      %s113 = sphi 0, %s113
      %s115 = sphi 0, %s113
      %s116 = sphi 0, %s115
      %s130 = sphi 0, %s116
      %s134 = sphi 0, %s134
      %s136 = sphi 0, %s134
      %s137 = sphi 0, %s136
      %s151 = sphi 0, %s137
      %s157 = sphi 0, %s159
      %s160 = sphi 0, %s157
      %s161 = sphi 0, %s160
      %s177 = sphi 0, %s161
    $region4: #{tpu_custom_call.1} parent=1 // loop_header_branch
      %21 = sbr.rel (%p19) target = $region8
    $region5: #{tpu_custom_call.1} parent=1 // loop_body
      %s23 = ssub.s32 %s18, 1
      %s24 = ssub.s32 %s18, 2
      %s31 = sadd.s32 1, %s26
      %p32 = scmp.ge.s32.totalorder %s31, 2
      %s33 = scalar_select %p32, 0, %s31
      %s34 = sadd.s32 1, %s25
      %s35 = scalar_select %p32, %s34, %s25
      %p36 = scmp.ge.s32.totalorder %s35, 1
      %s37 = scalar_select %p36, 0, %s35
      %s38 = ssub.s32 %s25, %s37
      %s39 = ssub.s32 %s26, %s33
      %s40 = sor.u32 %s38, %s39
      %p41 = scmp.eq.s32.totalorder %s40, 0
      %s43 = sadd.s32 %s42, 1
      %s44 = scalar_select %p41, %s42, %s43
      %p47 = pneg %p41
      %p48 = scmp.eq.s32.totalorder %s18, 1
      %p49 = por %p47, %p48
      %p50 = scmp.ne.s32.totalorder %s42, %s45
      %p51 = scmp.eq.s32.totalorder %s18, 0
      %p52 = por %p50, %p51
      %p53 = scmp.ne.s32.totalorder %s42, %s45
      %p54 = scmp.eq.s32.totalorder %s23, 1
      %p55 = por %p53, %p54
      %p56 = scmp.ne.s32.totalorder %s45, %s46
      %p57 = scmp.eq.s32.totalorder %s23, 0
      %p58 = por %p56, %p57
      %p59 = scmp.ne.s32.totalorder %s45, %s46
      %p60 = scmp.eq.s32.totalorder %s24, 1
      %p61 = por %p59, %p60
      %p63 = scmp.ne.s32.totalorder %s46, %s62
      %p64 = scmp.eq.s32.totalorder %s24, 0
      %p65 = por %p63, %p64
      %s66 = ssub.s32 %s26, %s33
      %p67 = scmp.eq.s32.totalorder %s66, 0
      %s69 = sadd.s32 %s68, 1
      %s70 = scalar_select %p67, %s68, %s69
      %p73 = pneg %p67
      %p74 = scmp.eq.s32.totalorder %s18, 1
      %p75 = por %p73, %p74
      %p76 = scmp.ne.s32.totalorder %s68, %s71
      %p77 = scmp.eq.s32.totalorder %s18, 0
      %p78 = por %p76, %p77
      %p79 = scmp.ne.s32.totalorder %s68, %s71
      %p80 = scmp.eq.s32.totalorder %s23, 1
      %p81 = por %p79, %p80
      %p82 = scmp.ne.s32.totalorder %s71, %s72
      %p83 = scmp.eq.s32.totalorder %s23, 0
      %p84 = por %p82, %p83
      %p85 = scmp.ne.s32.totalorder %s71, %s72
      %p86 = scmp.eq.s32.totalorder %s24, 1
      %p87 = por %p85, %p86
      %p89 = scmp.ne.s32.totalorder %s72, %s88
      %p90 = scmp.eq.s32.totalorder %s24, 0
      %p91 = por %p89, %p90
      %s93 = sadd.s32 %s92, 1
      %p96 = scmp.eq.s32.totalorder %s18, 1
      %p97 = scmp.ne.s32.totalorder %s92, %s94
      %p98 = scmp.eq.s32.totalorder %s18, 0
      %p99 = por %p97, %p98
      %p100 = scmp.ne.s32.totalorder %s92, %s94
      %p101 = scmp.eq.s32.totalorder %s23, 1
      %p102 = por %p100, %p101
      %p103 = scmp.ne.s32.totalorder %s94, %s95
      %p104 = scmp.eq.s32.totalorder %s23, 0
      %p105 = por %p103, %p104
      %p106 = scmp.ne.s32.totalorder %s94, %s95
      %p107 = scmp.eq.s32.totalorder %s24, 1
      %p108 = por %p106, %p107
      %p110 = scmp.ne.s32.totalorder %s95, %s109
      %p111 = scmp.eq.s32.totalorder %s24, 0
      %p112 = por %p110, %p111
      %s114 = sadd.s32 %s113, 1
      %p117 = scmp.eq.s32.totalorder %s18, 1
      %p118 = scmp.ne.s32.totalorder %s113, %s115
      %p119 = scmp.eq.s32.totalorder %s18, 0
      %p120 = por %p118, %p119
      %p121 = scmp.ne.s32.totalorder %s113, %s115
      %p122 = scmp.eq.s32.totalorder %s23, 1
      %p123 = por %p121, %p122
      %p124 = scmp.ne.s32.totalorder %s115, %s116
      %p125 = scmp.eq.s32.totalorder %s23, 0
      %p126 = por %p124, %p125
      %p127 = scmp.ne.s32.totalorder %s115, %s116
      %p128 = scmp.eq.s32.totalorder %s24, 1
      %p129 = por %p127, %p128
      %p131 = scmp.ne.s32.totalorder %s116, %s130
      %p132 = scmp.eq.s32.totalorder %s24, 0
      %p133 = por %p131, %p132
      %s135 = sadd.s32 %s134, 1
      %p138 = scmp.eq.s32.totalorder %s18, 1
      %p139 = scmp.ne.s32.totalorder %s134, %s136
      %p140 = scmp.eq.s32.totalorder %s18, 0
      %p141 = por %p139, %p140
      %p142 = scmp.ne.s32.totalorder %s134, %s136
      %p143 = scmp.eq.s32.totalorder %s23, 1
      %p144 = por %p142, %p143
      %p145 = scmp.ne.s32.totalorder %s136, %s137
      %p146 = scmp.eq.s32.totalorder %s23, 0
      %p147 = por %p145, %p146
      %p148 = scmp.ne.s32.totalorder %s136, %s137
      %p149 = scmp.eq.s32.totalorder %s24, 1
      %p150 = por %p148, %p149
      %p152 = scmp.ne.s32.totalorder %s137, %s151
      %p153 = scmp.eq.s32.totalorder %s24, 0
      %p154 = por %p152, %p153
      %s155 = ssub.s32 %s25, %s37
      %p156 = scmp.eq.s32.totalorder %s155, 0
      %s158 = sadd.s32 %s157, 1
      %s159 = scalar_select %p156, %s157, %s158
      %p162 = pneg %p156
      %p163 = scmp.eq.s32.totalorder %s18, 1
      %p164 = por %p162, %p163
      %p165 = scmp.ne.s32.totalorder %s157, %s160
      %p166 = scmp.eq.s32.totalorder %s18, 0
      %p167 = por %p165, %p166
      %p168 = scmp.ne.s32.totalorder %s157, %s160
      %p169 = scmp.eq.s32.totalorder %s23, 1
      %p170 = por %p168, %p169
      %p171 = scmp.ne.s32.totalorder %s160, %s161
      %p172 = scmp.eq.s32.totalorder %s23, 0
      %p173 = por %p171, %p172
      %p174 = scmp.ne.s32.totalorder %s160, %s161
      %p175 = scmp.eq.s32.totalorder %s24, 1
      %p176 = por %p174, %p175
      %p178 = scmp.ne.s32.totalorder %s161, %s177
      %p179 = scmp.eq.s32.totalorder %s24, 0
      %p180 = por %p178, %p179
      %p181 = scmp.le.s32.totalorder 1, %s18
      %p182 = scmp.lt.s32.totalorder %s18, 3
      %p183 = pnand %p181, %p182
      %p184 = pneg %p183
      // Predicated region
      $region9: #{tpu_custom_call.1} parent=5 // pred_check
        _
      $region10: #{tpu_custom_call.1} parent=5 // pred_check_branch
        %186 = sbr.rel (%p183) target = $region12
      $region11: #{tpu_custom_call.1} parent=5 // pred_region
        %s187 = ssub.s32 %s18, 1
        // Predicated region
        $region13: #{tpu_custom_call.1} parent=11 // pred_check
          %p188 = pneg %p105
        $region14: #{tpu_custom_call.1} parent=11 // pred_check_branch
          %190 = sbr.rel (%p188) target = $region16
        $region15: #{tpu_custom_call.1} parent=11 // pred_region
          _
        $region16: #{tpu_custom_call.1} parent=11 // pred_fallthru
          _
        // Predicated region
        $region17: #{tpu_custom_call.1} parent=11 // pred_check
          %p191 = pneg %p126
        $region18: #{tpu_custom_call.1} parent=11 // pred_check_branch
          %193 = sbr.rel (%p191) target = $region20
        $region19: #{tpu_custom_call.1} parent=11 // pred_region
          %195 = vsyncadd [#allocation7], 0
          %s196 = sshll.u32 %s3, 4
          %s197 = int_to_ptr.hbm [resolvable:$true] %s196
          %s198 = sshll.u32 [#allocation8], 4
          %s199 = int_to_ptr.vmem [resolvable:$true] %s198
          %204 = dma.hbm_to_vmem [thread:$0]  %s197, 1024, %s199, [#allocation7], 64, 64, 4
        $region20: #{tpu_custom_call.1} parent=11 // pred_fallthru
          _
        // Predicated region
        $region21: #{tpu_custom_call.1} parent=11 // pred_check
          %p205 = pneg %p147
        $region22: #{tpu_custom_call.1} parent=11 // pred_check_branch
          %207 = sbr.rel (%p205) target = $region24
        $region23: #{tpu_custom_call.1} parent=11 // pred_region
          _
        $region24: #{tpu_custom_call.1} parent=11 // pred_fallthru
          _
      $region12: #{tpu_custom_call.1} parent=5 // pred_fallthru
        _
      %p208 = scmp.lt.s32.totalorder %s18, 2
      // Predicated region
      $region25: #{tpu_custom_call.1} parent=5 // pred_check
        %p209 = pneg %p208
      $region26: #{tpu_custom_call.1} parent=5 // pred_check_branch
        %211 = sbr.rel (%p209) target = $region28
      $region27: #{tpu_custom_call.1} parent=5 // pred_region
        // Predicated region
        $region29: #{tpu_custom_call.1} parent=27 // pred_check
          %p212 = pneg %p52
        $region30: #{tpu_custom_call.1} parent=27 // pred_check_branch
          %214 = sbr.rel (%p212) target = $region32
        $region31: #{tpu_custom_call.1} parent=27 // pred_region
          %s215 = sand.u32 %s42, 1
          %s216 = scalar_lea.sflag [#allocation4], %s215
          %s217 = sand.u32 %s42, 1
          %s218 = smul.addr %s217, 8
          %s219 = scalar_lea.vmem [#allocation3], %s218
          %s220 = smul.u32 2, %s25
          %222 = vsyncadd %s216, 0
          %s223 = smul.addr %s220, 2
          %s224 = sadd.s32 %s26, %s223
          %s225 = smul.addr %s224, 4
          %s226 = scalar_lea.hbm %s0, %s225
          %s227 = sshll.u32 %s226, 4
          %s228 = int_to_ptr.hbm [resolvable:$true] %s227
          %s229 = sshll.u32 %s219, 4
          %s230 = int_to_ptr.vmem [resolvable:$true] %s229
          %235 = dma.hbm_to_vmem [thread:$0]  %s228, 128, %s230, %s216, 128, 64, 4
        $region32: #{tpu_custom_call.1} parent=27 // pred_fallthru
          _
        // Predicated region
        $region33: #{tpu_custom_call.1} parent=27 // pred_check
          %p236 = pneg %p78
        $region34: #{tpu_custom_call.1} parent=27 // pred_check_branch
          %238 = sbr.rel (%p236) target = $region36
        $region35: #{tpu_custom_call.1} parent=27 // pred_region
          %s239 = sand.u32 %s18, 1
          %s240 = scalar_lea.sflag [#allocation7], %s239
          %s241 = sand.u32 %s68, 1
          %s242 = smul.addr %s241, 64
          %s243 = scalar_lea.vmem [#allocation6], %s242
          %s244 = smul.u32 16, %s26
          %246 = vsyncadd %s240, 0
          %s247 = smul.addr %s244, 4
          %s248 = scalar_lea.hbm %s1, %s247
          %s249 = sshll.u32 %s248, 4
          %s250 = int_to_ptr.hbm [resolvable:$true] %s249
          %s251 = sshll.u32 %s243, 4
          %s252 = int_to_ptr.vmem [resolvable:$true] %s251
          %257 = dma.hbm_to_vmem [thread:$0]  %s250, 1024, %s252, %s240, 64, 64, 4
        $region36: #{tpu_custom_call.1} parent=27 // pred_fallthru
          _
      $region28: #{tpu_custom_call.1} parent=5 // pred_fallthru
        _
      %p258 = scmp.le.s32.totalorder 1, %s18
      %p259 = scmp.lt.s32.totalorder %s18, 3
      %p260 = pnand %p258, %p259
      %p261 = pneg %p260
      // Predicated region
      $region37: #{tpu_custom_call.1} parent=5 // pred_check
        _
      $region38: #{tpu_custom_call.1} parent=5 // pred_check_branch
        %263 = sbr.rel (%p260) target = $region40
      $region39: #{tpu_custom_call.1} parent=5 // pred_region
        %s264 = ssub.s32 %s18, 1
        %s265 = sand.u32 %s45, 1
        %s266 = scalar_lea.sflag [#allocation4], %s265
        %s267 = sand.u32 %s45, 1
        %s268 = smul.addr %s267, 8
        %s269 = scalar_lea.vmem [#allocation3], %s268
        // Predicated region
        $region41: #{tpu_custom_call.1} parent=39 // pred_check
          %p270 = pneg %p58
        $region42: #{tpu_custom_call.1} parent=39 // pred_check_branch
          %272 = sbr.rel (%p270) target = $region44
        $region43: #{tpu_custom_call.1} parent=39 // pred_region
          %274 = dma.done %s266, 128
        $region44: #{tpu_custom_call.1} parent=39 // pred_fallthru
          _
        %s275 = sand.u32 %s23, 1
        %s276 = scalar_lea.sflag [#allocation7], %s275
        %s277 = sand.u32 %s71, 1
        %s278 = smul.addr %s277, 64
        %s279 = scalar_lea.vmem [#allocation6], %s278
        // Predicated region
        $region45: #{tpu_custom_call.1} parent=39 // pred_check
          %p280 = pneg %p84
        $region46: #{tpu_custom_call.1} parent=39 // pred_check_branch
          %282 = sbr.rel (%p280) target = $region48
        $region47: #{tpu_custom_call.1} parent=39 // pred_region
          %284 = dma.done %s276, 1024
        $region48: #{tpu_custom_call.1} parent=39 // pred_fallthru
          _
        // Predicated region
        $region49: #{tpu_custom_call.1} parent=39 // pred_check
          %p285 = pneg %p126
        $region50: #{tpu_custom_call.1} parent=39 // pred_check_branch
          %287 = sbr.rel (%p285) target = $region52
        $region51: #{tpu_custom_call.1} parent=39 // pred_region
          %289 = dma.done [#allocation7], 1024
        $region52: #{tpu_custom_call.1} parent=39 // pred_fallthru
          _
        %s290 = sand.u32 %s45, 1
        %s291 = scalar_lea.sflag [#allocation4], %s290
        %s292 = sand.u32 %s45, 1
        %s293 = smul.addr %s292, 8
        %s294 = scalar_lea.vmem [#allocation3], %s293
        %p295 = pneg %p58
        %p296 = pneg %p55
        %s297 = sand.u32 %s23, 1
        %s298 = scalar_lea.sflag [#allocation7], %s297
        %s299 = sand.u32 %s71, 1
        %s300 = smul.addr %s299, 64
        %s301 = scalar_lea.vmem [#allocation6], %s300
        %p302 = pneg %p84
        %p303 = pneg %p81
        %p304 = pneg %p105
        %p305 = pneg %p102
        %p306 = pneg %p126
        %p307 = pneg %p123
        %p308 = pneg %p147
        %p309 = pneg %p144
        %p310 = pneg %p173
        %p311 = pneg %p170
        %s312 = smul.u32 2, %s27
        %s313 = smul.u32 16, %s28
        %s314 = smul.u32 2, %s27
        %p315 = scmp.eq.s32.totalorder %s28, 0
        // Predicated region
        $region53: #{tpu_custom_call.1} parent=39 // pred_check
          %p316 = pneg %p315
        $region54: #{tpu_custom_call.1} parent=39 // pred_check_branch
          %318 = sbr.rel (%p316) target = $region56
        $region55: #{tpu_custom_call.1} parent=39 // pred_region
          %319 = vst [vmem:[#allocation2] sm:$0xff] 0.0
          %320 = vst [vmem:[#allocation2 + $0x8] sm:$0xff] 0.0
        $region56: #{tpu_custom_call.1} parent=39 // pred_fallthru
          _
        %v321 = vld [vmem:[#allocation2] sm:$0xff]
        %v322 = vld [vmem:[#allocation2 + $0x8] sm:$0xff]
        %v323 = vld [vmem:[%s269] sm:$0xf]
        %v324 = vld [vmem:[%s269 + $0x4] sm:$0xf]
        %v325 = vld [vmem:[%s279] sm:$0xf]
        %v326 = vld [vmem:[%s279 + $0x4] sm:$0xf]
        %v327 = vld [vmem:[%s279 + $0x8] sm:$0xf]
        %v328 = vld [vmem:[%s279 + $0xc] sm:$0xf]
        %v329 = vld [vmem:[%s279 + $0x10] sm:$0xf]
        %v330 = vld [vmem:[%s279 + $0x14] sm:$0xf]
        %v331 = vld [vmem:[%s279 + $0x18] sm:$0xf]
        %v332 = vld [vmem:[%s279 + $0x1c] sm:$0xf]
        %v333 = vld [vmem:[%s279 + $0x20] sm:$0xf]
        %v334 = vld [vmem:[%s279 + $0x24] sm:$0xf]
        %v335 = vld [vmem:[%s279 + $0x28] sm:$0xf]
        %v336 = vld [vmem:[%s279 + $0x2c] sm:$0xf]
        %v337 = vld [vmem:[%s279 + $0x30] sm:$0xf]
        %v338 = vld [vmem:[%s279 + $0x34] sm:$0xf]
        %v339 = vld [vmem:[%s279 + $0x38] sm:$0xf]
        %v340 = vld [vmem:[%s279 + $0x3c] sm:$0xf]
        %v343 = vunpack.c.l.b16 %v323
        %v344 = vunpack.c.l.b16 %v324
        %v345 = vpack.c.b16 %v344, %v343
        %v363 = vunpack.c.l.b16 %v325
        %v364 = vunpack.c.l.b16 %v326
        %v365 = vunpack.c.l.b16 %v327
        %v366 = vunpack.c.l.b16 %v328
        %v367 = vunpack.c.l.b16 %v329
        %v368 = vunpack.c.l.b16 %v330
        %v369 = vunpack.c.l.b16 %v331
        %v370 = vunpack.c.l.b16 %v332
        %v371 = vunpack.c.l.b16 %v333
        %v372 = vunpack.c.l.b16 %v334
        %v373 = vunpack.c.l.b16 %v335
        %v374 = vunpack.c.l.b16 %v336
        %v375 = vunpack.c.l.b16 %v337
        %v376 = vunpack.c.l.b16 %v338
        %v377 = vunpack.c.l.b16 %v339
        %v378 = vunpack.c.l.b16 %v340
        %v379 = vpack.c.b16 %v364, %v363
        %v380 = vpack.c.b16 %v366, %v365
        %v381 = vpack.c.b16 %v368, %v367
        %v382 = vpack.c.b16 %v370, %v369
        %v383 = vpack.c.b16 %v372, %v371
        %v384 = vpack.c.b16 %v374, %v373
        %v385 = vpack.c.b16 %v376, %v375
        %v386 = vpack.c.b16 %v378, %v377
        %395 = vmatpush.bf16.msra.mxu0 %v386
        %396 = vmatpush.bf16.msra.mxu0 %v385
        %397 = vmatpush.bf16.msra.mxu0 %v384
        %398 = vmatpush.bf16.msra.mxu0 %v383
        %399 = vmatpush.bf16.msra.mxu0 %v382
        %400 = vmatpush.bf16.msra.mxu0 %v381
        %401 = vmatpush.bf16.msra.mxu0 %v380
        %402 = vmatpush.bf16.msra.mxu0 %v379
        %403 = vmatmul.bf16.gmra.mxu0 %v345
        %v404 = vpop.f32.mrf.mxu0
        %v405 = vadd.f32 0.0, %v404
        %v406 = vpop.f32.mrf.mxu0
        %v407 = vadd.f32 0.0, %v406
        %408 = vdwg.mxu0
        %v409 = vadd.f32 %v321, %v405
        %v410 = vadd.f32 %v322, %v407
        %411 = vst [vmem:[#allocation2] sm:$0xff] %v409
        %412 = vst [vmem:[#allocation2 + $0x8] sm:$0xff] %v410
        %p413 = scmp.eq.s32.totalorder %s28, 1
        // Predicated region
        $region57: #{tpu_custom_call.1} parent=39 // pred_check
          %p414 = pneg %p413
        $region58: #{tpu_custom_call.1} parent=39 // pred_check_branch
          %416 = sbr.rel (%p414) target = $region60
        $region59: #{tpu_custom_call.1} parent=39 // pred_region
          %v417 = vld [vmem:[#allocation2] sm:$0xff]
          %v418 = vld [vmem:[#allocation2 + $0x8] sm:$0xff]
          %v419 = vld [vmem:[%s2] sm:$0x1]
          %v421 = vperm.slane %v419, 0
          %v423 = vadd.f32 %v417, %v421
          %v424 = vadd.f32 %v418, %v421
          %v425 = vmax.f32 %v423, 0.0
          %v426 = vmax.f32 %v424, 0.0
          %v427 = vpack.c.bf16 %v426, %v425
          %v428 = vld [vmem:[#allocation8] sm:$0xf]
          %v429 = vld [vmem:[#allocation8 + $0x4] sm:$0xf]
          %v430 = vld [vmem:[#allocation8 + $0x8] sm:$0xf]
          %v431 = vld [vmem:[#allocation8 + $0xc] sm:$0xf]
          %v432 = vld [vmem:[#allocation8 + $0x10] sm:$0xf]
          %v433 = vld [vmem:[#allocation8 + $0x14] sm:$0xf]
          %v434 = vld [vmem:[#allocation8 + $0x18] sm:$0xf]
          %v435 = vld [vmem:[#allocation8 + $0x1c] sm:$0xf]
          %v436 = vld [vmem:[#allocation8 + $0x20] sm:$0xf]
          %v437 = vld [vmem:[#allocation8 + $0x24] sm:$0xf]
          %v438 = vld [vmem:[#allocation8 + $0x28] sm:$0xf]
          %v439 = vld [vmem:[#allocation8 + $0x2c] sm:$0xf]
          %v440 = vld [vmem:[#allocation8 + $0x30] sm:$0xf]
          %v441 = vld [vmem:[#allocation8 + $0x34] sm:$0xf]
          %v442 = vld [vmem:[#allocation8 + $0x38] sm:$0xf]
          %v443 = vld [vmem:[#allocation8 + $0x3c] sm:$0xf]
          %v444 = vld [vmem:[%s4] sm:$0x1]
          %v446 = vperm.slane %v444, 0
          %v464 = vunpack.c.l.b16 %v428
          %v465 = vunpack.c.l.b16 %v429
          %v466 = vunpack.c.l.b16 %v430
          %v467 = vunpack.c.l.b16 %v431
          %v468 = vunpack.c.l.b16 %v432
          %v469 = vunpack.c.l.b16 %v433
          %v470 = vunpack.c.l.b16 %v434
          %v471 = vunpack.c.l.b16 %v435
          %v472 = vunpack.c.l.b16 %v436
          %v473 = vunpack.c.l.b16 %v437
          %v474 = vunpack.c.l.b16 %v438
          %v475 = vunpack.c.l.b16 %v439
          %v476 = vunpack.c.l.b16 %v440
          %v477 = vunpack.c.l.b16 %v441
          %v478 = vunpack.c.l.b16 %v442
          %v479 = vunpack.c.l.b16 %v443
          %v480 = vpack.c.b16 %v465, %v464
          %v481 = vpack.c.b16 %v467, %v466
          %v482 = vpack.c.b16 %v469, %v468
          %v483 = vpack.c.b16 %v471, %v470
          %v484 = vpack.c.b16 %v473, %v472
          %v485 = vpack.c.b16 %v475, %v474
          %v486 = vpack.c.b16 %v477, %v476
          %v487 = vpack.c.b16 %v479, %v478
          %496 = vmatpush.bf16.msra.mxu0 %v487
          %497 = vmatpush.bf16.msra.mxu0 %v486
          %498 = vmatpush.bf16.msra.mxu0 %v485
          %499 = vmatpush.bf16.msra.mxu0 %v484
          %500 = vmatpush.bf16.msra.mxu0 %v483
          %501 = vmatpush.bf16.msra.mxu0 %v482
          %502 = vmatpush.bf16.msra.mxu0 %v481
          %503 = vmatpush.bf16.msra.mxu0 %v480
          %504 = vmatmul.bf16.gmra.mxu0 %v427
          %v505 = vpop.f32.mrf.mxu0
          %v506 = vadd.f32 %v446, %v505
          %v507 = vpop.f32.mrf.mxu0
          %v508 = vadd.f32 %v446, %v507
          %509 = vdwg.mxu0
          %510 = vst [vmem:[#allocation9] sm:$0xff] %v506
          %511 = vst [vmem:[#allocation9 + $0x8] sm:$0xff] %v508
        $region60: #{tpu_custom_call.1} parent=39 // pred_fallthru
          _
        // Predicated region
        $region61: #{tpu_custom_call.1} parent=39 // pred_check
          %p512 = pneg %p170
        $region62: #{tpu_custom_call.1} parent=39 // pred_check_branch
          %514 = sbr.rel (%p512) target = $region64
        $region63: #{tpu_custom_call.1} parent=39 // pred_region
          %s515 = smul.u32 2, %s27
          %517 = vsyncadd [#allocation5], 0
          %s518 = smul.addr %s515, 8
          %s519 = scalar_lea.hbm %s5, %s518
          %s520 = sshll.u32 [#allocation9], 4
          %s521 = int_to_ptr.vmem [resolvable:$true] %s520
          %s522 = sshll.u32 %s519, 4
          %s523 = int_to_ptr.hbm [resolvable:$true] %s522
          %528 = dma.vmem_to_hbm [thread:$0]  %s521, 256, %s523, [#allocation5], 128, 128, 8
        $region64: #{tpu_custom_call.1} parent=39 // pred_fallthru
          _
        // Predicated region
        $region65: #{tpu_custom_call.1} parent=39 // pred_check
          %p529 = pneg %p170
        $region66: #{tpu_custom_call.1} parent=39 // pred_check_branch
          %531 = sbr.rel (%p529) target = $region68
        $region67: #{tpu_custom_call.1} parent=39 // pred_region
          %533 = dma.done [#allocation5], 256
        $region68: #{tpu_custom_call.1} parent=39 // pred_fallthru
          _
      $region40: #{tpu_custom_call.1} parent=5 // pred_fallthru
        _
      %p534 = scmp.le.s32.totalorder 2, %s18
      // Predicated region
      $region69: #{tpu_custom_call.1} parent=5 // pred_check
        %p535 = pneg %p534
      $region70: #{tpu_custom_call.1} parent=5 // pred_check_branch
        %537 = sbr.rel (%p535) target = $region72
      $region71: #{tpu_custom_call.1} parent=5 // pred_region
        %s538 = ssub.s32 %s18, 2
      $region72: #{tpu_custom_call.1} parent=5 // pred_fallthru
        _
    $region6: #{tpu_custom_call.1} parent=1 // loop_footer
      %s22 = sadd.s32 1, %s18
    $region7: #{tpu_custom_call.1} parent=1 // loop_footer_branch
      %17 = sbr.rel target = $region3
    $region8: #{tpu_custom_call.1} parent=1 // loop_exit
      _
    %539 = vsyncpa [#allocation4], 1
    %s540 = scalar_lea.sflag [#allocation4], 1
    %541 = vsyncpa %s540, 1
    %542 = vsyncpa [#allocation7], 1
    %s543 = scalar_lea.sflag [#allocation7], 1
    %544 = vsyncpa %s543, 1
    %545 = vsyncpa [#allocation5], 1
    %s546 = scalar_lea.sflag [#allocation5], 1
    %547 = vsyncpa %s546, 1

</llo_original>
